<compile_context>
chip_gen: v7x
topology: tpu7x:2x2x1
jax: 0.10.0
libtpu: 0.0.40
codegen_flags: <defaults>
</compile_context>

<pallas_src>
import functools

import jax
import jax.numpy as jnp
from jax.experimental import pallas as pl
from jax.experimental.pallas import tpu as pltpu

IN_FEATURES = 25
HIDDEN = 25
OUT_FEATURES = 2
N_HIDDEN_LAYERS = 3

# Conservative per-call VMEM budget so the default tile fits every chip's
# default scoped VMEM (v5e: 16 MiB, v6e/v7x: 32 MiB) without extra flags.
_VMEM_BUDGET_BYTES = 12 * 1024 * 1024


def _mlp_kernel(x_ref, wh_ref, bh_ref, w4_ref, b4_ref, o_ref, *,
                apply_softmax, x_transposed):
    # x_ref : (tile, 25) f32  (or (25, tile) if x_transposed)
    # wh_ref: (3, 25, 25) f32 stacked hidden weights, stored (out, in)
    # bh_ref: (3, 25, 1)  f32 stacked hidden bias columns
    # w4_ref: (2, 25) f32, b4_ref: (2, 1) f32
    # o_ref : (2, tile) f32 -- batch on the lane axis (lane-dense stores)
    w1 = wh_ref[0].astype(jnp.bfloat16)
    if x_transposed:
        # Batch is already on the lane axis: plain (25,25)@(25,tile) matmul.
        z = jnp.dot(w1, x_ref[...].astype(jnp.bfloat16),
                    preferred_element_type=jnp.float32)
    else:
        # "NT" contraction over the 25-wide feature axis of both operands:
        # fuses the batch->lanes transpose into the first MXU matmul.
        z = jax.lax.dot_general(w1, x_ref[...].astype(jnp.bfloat16),
                                (((1,), (1,)), ((), ())),
                                preferred_element_type=jnp.float32)
    h = jnp.maximum(z + bh_ref[0], 0.0).astype(jnp.bfloat16)      # (25, tile)

    for layer in (1, 2):
        w = wh_ref[layer].astype(jnp.bfloat16)
        z = jnp.dot(w, h, preferred_element_type=jnp.float32) + bh_ref[layer]
        h = jnp.maximum(z, 0.0).astype(jnp.bfloat16)               # (25, tile)

    out = jnp.dot(w4_ref[...].astype(jnp.bfloat16), h,
                  preferred_element_type=jnp.float32) + b4_ref[...]  # (2, tile)

    if apply_softmax:
        # Exact 2-class softmax: softmax([a, b]) = [sigmoid(a-b), 1-sigmoid(a-b)].
        # Avoids cross-lane reductions; exp runs on the EUP slot.
        d = out[0:1, :] - out[1:2, :]
        p0 = 1.0 / (1.0 + jnp.exp(-d))                             # (1, tile)
        row = jax.lax.broadcasted_iota(jnp.int32, out.shape, 0)
        out = jnp.where(row == 0, p0, 1.0 - p0)

    o_ref[...] = out.astype(o_ref.dtype)


def _choose_tile(batch, block_b, x_transposed):
    """Pick a batch tile: VMEM-budgeted, lane-aligned, >= 2 grid steps when big."""
    if batch <= 256:
        return batch  # single block spanning the full (tiny) batch
    # Rough VMEM bytes per batch row: double-buffered x tile (lane-padded to
    # 128 lanes in the (tile,25) layout, sublane-padded to 32 in (25,tile)),
    # a few (25, tile) f32 activation temporaries, double-buffered (2, tile) out.
    x_row = 2 * ((32 if x_transposed else 128) * 4)
    per_row = x_row + 4 * 32 * 4 + 2 * 8 * 4
    max_rows = max(128, (_VMEM_BUDGET_BYTES // per_row) // 128 * 128)
    tile = min(int(block_b), max_rows, -(-batch // 2))   # >= 2 steps (v7x megacore)
    tile = max(128, tile // 128 * 128)                   # multiple of 128 lanes
    tile = min(tile, batch // 128 * 128)                 # block never exceeds the array
    return tile


def merge_psn_forward(x, params, phase="train", *, block_b=4096,
                      x_is_transposed=False):
    """MergePSN forward pass as one fused Pallas kernel.

    x: (B, 25) array (or (25, B) if x_is_transposed=True, which gives a fully
    lane-dense input path).  params: dict with weights stored PyTorch-style
    (out_features, in_features) and bias columns.  Returns (B, 2) float32.
    """
    if x_is_transposed:
        assert x.shape[0] == IN_FEATURES
        batch = x.shape[1]
    else:
        assert x.shape[1] == IN_FEATURES
        batch = x.shape[0]

    tile = _choose_tile(batch, block_b, x_is_transposed)
    grid = (pl.cdiv(batch, tile),)

    if x_is_transposed:
        x_spec = pl.BlockSpec((IN_FEATURES, tile), lambda i: (0, i))
    else:
        x_spec = pl.BlockSpec((tile, IN_FEATURES), lambda i: (i, 0))

    kernel = functools.partial(_mlp_kernel,
                               apply_softmax=(phase == "eval"),
                               x_transposed=x_is_transposed)

    out_t = pl.pallas_call(
        kernel,
        out_shape=jax.ShapeDtypeStruct((OUT_FEATURES, batch), jnp.float32),
        grid=grid,
        in_specs=[
            x_spec,
            pl.BlockSpec((N_HIDDEN_LAYERS, HIDDEN, HIDDEN), lambda i: (0, 0, 0)),
            pl.BlockSpec((N_HIDDEN_LAYERS, HIDDEN, 1), lambda i: (0, 0, 0)),
            pl.BlockSpec((OUT_FEATURES, HIDDEN), lambda i: (0, 0)),
            pl.BlockSpec((OUT_FEATURES, 1), lambda i: (0, 0)),
        ],
        out_specs=pl.BlockSpec((OUT_FEATURES, tile), lambda i: (0, i)),
        compiler_params=pltpu.CompilerParams(
            dimension_semantics=("parallel",)),
    )(x, params["wh"], params["bh"], params["w4"], params["b4"])

    # Tiny (2, B) -> (B, 2) transpose to match the PyTorch module's output
    # layout; negligible (8*B bytes).  Downstream consumers that can take the
    # transposed layout can use out_t directly.
    return out_t.T


# --------------------------- init & reference ------------------------------

def _xavier_uniform(key, fan_out, fan_in):
    limit = (6.0 / (fan_in + fan_out)) ** 0.5
    return jax.random.uniform(key, (fan_out, fan_in), jnp.float32, -limit, limit)


def _default_linear_weight(key, fan_out, fan_in):
    # PyTorch nn.Linear default (kaiming_uniform_, a=sqrt(5)) == U(-1/sqrt(fan_in), 1/sqrt(fan_in)).
    bound = 1.0 / (fan_in ** 0.5)
    return jax.random.uniform(key, (fan_out, fan_in), jnp.float32, -bound, bound)


def _default_linear_bias(key, fan_out, fan_in):
    bound = 1.0 / (fan_in ** 0.5)
    return jax.random.uniform(key, (fan_out, 1), jnp.float32, -bound, bound)


def init_params(key):
    ks = jax.random.split(key, 8)
    wh = jnp.stack([
        _xavier_uniform(ks[0], HIDDEN, IN_FEATURES),
        _xavier_uniform(ks[1], HIDDEN, HIDDEN),
        _xavier_uniform(ks[2], HIDDEN, HIDDEN),
    ])                                                     # (3, out=25, in=25)
    bh = jnp.stack([
        _default_linear_bias(ks[3], HIDDEN, IN_FEATURES),
        _default_linear_bias(ks[4], HIDDEN, HIDDEN),
        _default_linear_bias(ks[5], HIDDEN, HIDDEN),
    ])                                                     # (3, 25, 1)
    return {
        "wh": wh,
        "bh": bh,
        "w4": _default_linear_weight(ks[6], OUT_FEATURES, HIDDEN),  # (2, 25)
        "b4": _default_linear_bias(ks[7], OUT_FEATURES, HIDDEN),    # (2, 1)
    }


def _reference_forward(x, params, phase):
    # Mirrors the kernel numerics: bf16 weights/activations, f32 accumulation,
    # f32 bias add + ReLU, bf16 re-quantization between layers.
    h = x.astype(jnp.bfloat16)
    for layer in range(N_HIDDEN_LAYERS):
        w = params["wh"][layer].astype(jnp.bfloat16)               # (out, in)
        z = jnp.dot(h, w.T, preferred_element_type=jnp.float32)
        z = z + params["bh"][layer][:, 0]
        h = jnp.maximum(z, 0.0).astype(jnp.bfloat16)
    out = jnp.dot(h, params["w4"].astype(jnp.bfloat16).T,
                  preferred_element_type=jnp.float32) + params["b4"][:, 0]
    if phase == "eval":
        out = jax.nn.softmax(out, axis=1)
    return out


if __name__ == "__main__":
    key = jax.random.PRNGKey(0)
    pkey, k1, k2 = jax.random.split(key, 3)
    params = init_params(pkey)

    # Small batch: single full-array block (no padding, no wrapper ops on x).
    x_small = jax.random.normal(k1, (37, IN_FEATURES), jnp.float32)
    out_train = merge_psn_forward(x_small, params, phase="train")
    out_eval = merge_psn_forward(x_small, params, phase="eval")
    # Pre-transposed producer handoff (fully lane-dense input path).
    out_trans = merge_psn_forward(x_small.T, params, phase="train",
                                  x_is_transposed=True)

    # Larger batch: multi-step cdiv grid with a ragged last block (no jnp.pad).
    x_big = jax.random.normal(k2, (300, IN_FEATURES), jnp.float32)
    out_big = merge_psn_forward(x_big, params, phase="train", block_b=128)

    jax.block_until_ready((out_train, out_eval, out_trans, out_big))

    ref_train = _reference_forward(x_small, params, "train")
    ref_eval = _reference_forward(x_small, params, "eval")
    ref_big = _reference_forward(x_big, params, "train")

    assert out_train.shape == (37, OUT_FEATURES)
    assert out_eval.shape == (37, OUT_FEATURES)
    assert out_big.shape == (300, OUT_FEATURES)
    assert jnp.allclose(out_train, ref_train, atol=1e-3, rtol=1e-3)
    assert jnp.allclose(out_trans, ref_train, atol=1e-3, rtol=1e-3)
    assert jnp.allclose(out_big, ref_big, atol=1e-3, rtol=1e-3)
    # Eval: exact 2-class softmax (sigmoid form) -> tight tolerances.
    assert jnp.allclose(out_eval, ref_eval, atol=1e-3, rtol=1e-3)
    assert jnp.allclose(jnp.sum(out_eval, axis=1), 1.0, atol=1e-4)

    print("KERNEL_OK")
</pallas_src>

<mosaic_0001>
module attributes {stable_mosaic.version = 11 : i64} {
  func.func @_mlp_kernel(%arg0: i32, %arg1: memref<37x25xf32, #tpu.memory_space<vmem>>, %arg2: memref<3x25x25xf32, #tpu.memory_space<vmem>>, %arg3: memref<3x25x1xf32, #tpu.memory_space<vmem>>, %arg4: memref<2x25xf32, #tpu.memory_space<vmem>>, %arg5: memref<2x1xf32, #tpu.memory_space<vmem>>, %arg6: memref<2x37xf32, #tpu.memory_space<vmem>>) attributes {dimension_semantics = [#tpu.dimension_semantics<parallel>], iteration_bounds = array<i64: 1>, scalar_prefetch = 0 : i64, scratch_operands = 0 : i64, tpu.core_type = #tpu.core_type<tc>, window_params = [{transform_indices = @transform_0, window_bounds = array<i64: 37, 25>}, {pipeline_mode = #tpu.pipeline_mode<synchronous>, transform_indices = @transform_1, window_bounds = array<i64: 3, 25, 25>}, {pipeline_mode = #tpu.pipeline_mode<synchronous>, transform_indices = @transform_2, window_bounds = array<i64: 3, 25, 1>}, {pipeline_mode = #tpu.pipeline_mode<synchronous>, transform_indices = @transform_3, window_bounds = array<i64: 2, 25>}, {pipeline_mode = #tpu.pipeline_mode<synchronous>, transform_indices = @transform_4, window_bounds = array<i64: 2, 1>}, {transform_indices = @transform_5, window_bounds = array<i64: 2, 37>}]} {
    %c0 = arith.constant 0 : index
    %c0_0 = arith.constant 0 : index
    %c0_1 = arith.constant 0 : index
    %0 = vector.load %arg2[%c0, %c0_0, %c0_1] : memref<3x25x25xf32, #tpu.memory_space<vmem>>, vector<1x25x25xf32>
    %1 = vector.shape_cast %0 : vector<1x25x25xf32> to vector<25x25xf32>
    %2 = arith.truncf %1 : vector<25x25xf32> to vector<25x25xbf16>
    %c0_2 = arith.constant 0 : index
    %c0_3 = arith.constant 0 : index
    %3 = vector.load %arg1[%c0_2, %c0_3] : memref<37x25xf32, #tpu.memory_space<vmem>>, vector<37x25xf32>
    %4 = arith.truncf %3 : vector<37x25xf32> to vector<37x25xbf16>
    %cst = arith.constant dense<0.000000e+00> : vector<25x37xf32>
    %5 = tpu.matmul %2, %4, %cst {dimension_numbers = #tpu.dot_dimension_numbers<[1], [1], [0], [0], [0, 0, 1, 0], [], []>} : vector<25x25xbf16>, vector<37x25xbf16>, vector<25x37xf32> -> vector<25x37xf32>
    %c0_4 = arith.constant 0 : index
    %c0_5 = arith.constant 0 : index
    %c0_6 = arith.constant 0 : index
    %6 = vector.load %arg3[%c0_4, %c0_5, %c0_6] : memref<3x25x1xf32, #tpu.memory_space<vmem>>, vector<1x25x1xf32>
    %7 = vector.shape_cast %6 : vector<1x25x1xf32> to vector<25x1xf32>
    %8 = vector.broadcast %7 : vector<25x1xf32> to vector<25x37xf32>
    %9 = arith.addf %5, %8 : vector<25x37xf32>
    %cst_7 = arith.constant 0.000000e+00 : f32
    %10 = vector.broadcast %cst_7 : f32 to vector<25x37xf32>
    %11 = arith.maximumf %9, %10 : vector<25x37xf32>
    %12 = arith.truncf %11 : vector<25x37xf32> to vector<25x37xbf16>
    %c1 = arith.constant 1 : index
    %c0_8 = arith.constant 0 : index
    %c0_9 = arith.constant 0 : index
    %13 = vector.load %arg2[%c1, %c0_8, %c0_9] : memref<3x25x25xf32, #tpu.memory_space<vmem>>, vector<1x25x25xf32>
    %14 = vector.shape_cast %13 : vector<1x25x25xf32> to vector<25x25xf32>
    %15 = arith.truncf %14 : vector<25x25xf32> to vector<25x25xbf16>
    %cst_10 = arith.constant dense<0.000000e+00> : vector<25x37xf32>
    %16 = tpu.matmul %15, %12, %cst_10 {dimension_numbers = #tpu.dot_dimension_numbers<[1], [0], [0], [1], [0, 0, 1, 1], [], []>} : vector<25x25xbf16>, vector<25x37xbf16>, vector<25x37xf32> -> vector<25x37xf32>
    %c1_11 = arith.constant 1 : index
    %c0_12 = arith.constant 0 : index
    %c0_13 = arith.constant 0 : index
    %17 = vector.load %arg3[%c1_11, %c0_12, %c0_13] : memref<3x25x1xf32, #tpu.memory_space<vmem>>, vector<1x25x1xf32>
    %18 = vector.shape_cast %17 : vector<1x25x1xf32> to vector<25x1xf32>
    %19 = vector.broadcast %18 : vector<25x1xf32> to vector<25x37xf32>
    %20 = arith.addf %16, %19 : vector<25x37xf32>
    %cst_14 = arith.constant 0.000000e+00 : f32
    %21 = vector.broadcast %cst_14 : f32 to vector<25x37xf32>
    %22 = arith.maximumf %20, %21 : vector<25x37xf32>
    %23 = arith.truncf %22 : vector<25x37xf32> to vector<25x37xbf16>
    %c2 = arith.constant 2 : index
    %c0_15 = arith.constant 0 : index
    %c0_16 = arith.constant 0 : index
    %24 = vector.load %arg2[%c2, %c0_15, %c0_16] : memref<3x25x25xf32, #tpu.memory_space<vmem>>, vector<1x25x25xf32>
    %25 = vector.shape_cast %24 : vector<1x25x25xf32> to vector<25x25xf32>
    %26 = arith.truncf %25 : vector<25x25xf32> to vector<25x25xbf16>
    %cst_17 = arith.constant dense<0.000000e+00> : vector<25x37xf32>
    %27 = tpu.matmul %26, %23, %cst_17 {dimension_numbers = #tpu.dot_dimension_numbers<[1], [0], [0], [1], [0, 0, 1, 1], [], []>} : vector<25x25xbf16>, vector<25x37xbf16>, vector<25x37xf32> -> vector<25x37xf32>
    %c2_18 = arith.constant 2 : index
    %c0_19 = arith.constant 0 : index
    %c0_20 = arith.constant 0 : index
    %28 = vector.load %arg3[%c2_18, %c0_19, %c0_20] : memref<3x25x1xf32, #tpu.memory_space<vmem>>, vector<1x25x1xf32>
    %29 = vector.shape_cast %28 : vector<1x25x1xf32> to vector<25x1xf32>
    %30 = vector.broadcast %29 : vector<25x1xf32> to vector<25x37xf32>
    %31 = arith.addf %27, %30 : vector<25x37xf32>
    %cst_21 = arith.constant 0.000000e+00 : f32
    %32 = vector.broadcast %cst_21 : f32 to vector<25x37xf32>
    %33 = arith.maximumf %31, %32 : vector<25x37xf32>
    %34 = arith.truncf %33 : vector<25x37xf32> to vector<25x37xbf16>
    %c0_22 = arith.constant 0 : index
    %c0_23 = arith.constant 0 : index
    %35 = vector.load %arg4[%c0_22, %c0_23] : memref<2x25xf32, #tpu.memory_space<vmem>>, vector<2x25xf32>
    %36 = arith.truncf %35 : vector<2x25xf32> to vector<2x25xbf16>
    %cst_24 = arith.constant dense<0.000000e+00> : vector<2x37xf32>
    %37 = tpu.matmul %36, %34, %cst_24 {dimension_numbers = #tpu.dot_dimension_numbers<[1], [0], [0], [1], [0, 0, 1, 1], [], []>} : vector<2x25xbf16>, vector<25x37xbf16>, vector<2x37xf32> -> vector<2x37xf32>
    %c0_25 = arith.constant 0 : index
    %c0_26 = arith.constant 0 : index
    %38 = vector.load %arg5[%c0_25, %c0_26] : memref<2x1xf32, #tpu.memory_space<vmem>>, vector<2x1xf32>
    %39 = vector.broadcast %38 : vector<2x1xf32> to vector<2x37xf32>
    %40 = arith.addf %37, %39 : vector<2x37xf32>
    %c0_27 = arith.constant 0 : index
    %c0_28 = arith.constant 0 : index
    %41 = vector.load %arg6[%c0_27, %c0_28] : memref<2x37xf32, #tpu.memory_space<vmem>>, vector<2x37xf32>
    tpu.vector_store %arg6[%c0_27, %c0_28], %40 {strides = array<i32>} : memref<2x37xf32, #tpu.memory_space<vmem>>, vector<2x37xf32>,
    return
  }
  func.func @transform_0(%arg0: i32) -> (i32, i32) {
    %c0_i32 = arith.constant 0 : i32
    %c0_i32_0 = arith.constant 0 : i32
    return %arg0, %c0_i32 : i32, i32
  }
  func.func @transform_1(%arg0: i32) -> (i32, i32, i32) {
    %c0_i32 = arith.constant 0 : i32
    %c0_i32_0 = arith.constant 0 : i32
    %c0_i32_1 = arith.constant 0 : i32
    %c0_i32_2 = arith.constant 0 : i32
    return %c0_i32, %c0_i32_0, %c0_i32_1 : i32, i32, i32
  }
  func.func @transform_2(%arg0: i32) -> (i32, i32, i32) {
    %c0_i32 = arith.constant 0 : i32
    %c0_i32_0 = arith.constant 0 : i32
    %c0_i32_1 = arith.constant 0 : i32
    %c0_i32_2 = arith.constant 0 : i32
    return %c0_i32, %c0_i32_0, %c0_i32_1 : i32, i32, i32
  }
  func.func @transform_3(%arg0: i32) -> (i32, i32) {
    %c0_i32 = arith.constant 0 : i32
    %c0_i32_0 = arith.constant 0 : i32
    %c0_i32_1 = arith.constant 0 : i32
    return %c0_i32, %c0_i32_0 : i32, i32
  }
  func.func @transform_4(%arg0: i32) -> (i32, i32) {
    %c0_i32 = arith.constant 0 : i32
    %c0_i32_0 = arith.constant 0 : i32
    %c0_i32_1 = arith.constant 0 : i32
    return %c0_i32, %c0_i32_0 : i32, i32
  }
  func.func @transform_5(%arg0: i32) -> (i32, i32) {
    %c0_i32 = arith.constant 0 : i32
    %c0_i32_0 = arith.constant 0 : i32
    return %c0_i32, %arg0 : i32, i32
  }
}

</mosaic_0001>

<llo_original>
// kernel: tpu_custom_call.1
$region0: #{tpu_custom_call.1}
  #allocation0 [shape = 'u32[]', space=smem, size = 0x4, offset = 0x4, fixed_abs, tag = 'smem constant byte address 0x4 - core index']
  #allocation1 [shape = 'u32[144,128]{1,0:T(1,128)}', space=vmem, size = 0x12000, scoped, tag = 'internal scratch']
  %s0 = inlined_call_operand.vmem [shape: f32[37,25], index: 0, kind: input, shape index: {}]
  %s1 = inlined_call_operand.vmem [shape: f32[3,25,25], index: 1, kind: input, shape index: {}]
  %s2 = inlined_call_operand.vmem [shape: f32[3,25,1], index: 2, kind: input, shape index: {}]
  %s3 = inlined_call_operand.vmem [shape: f32[2,25], index: 3, kind: input, shape index: {}]
  %s4 = inlined_call_operand.vmem [shape: f32[2,1], index: 4, kind: input, shape index: {}]
  %s5 = inlined_call_operand.hbm [shape: f32[2,37], index: 5, kind: output, shape index: {}]
  %s6 = sld [smem:[#allocation0]]
  $region30: #{tpu_custom_call.1} parent=0
    _
  %s8 = ssub.s32 1, %s6
  %s9 = scalar_select 0, %s8, %s6
  $region1: #{tpu_custom_call.1} parent=0
    #allocation2 [shape = 'u8[1024]{0}', space=vmem, size = 0x400, scoped, tag = 'output window, operand 0, single buffered']
    #allocation3 [shape = 's32[1]{0}', space=sflag, size = 0x4, scoped, tag = 'scoped memory for tpu_custom_call.1']
    %10 = vsyncpa [#allocation3], 0
    // Predicated region
    $region2: #{tpu_custom_call.1} parent=1 // pred_check
      _
    $region3: #{tpu_custom_call.1} parent=1 // pred_check_branch
      %12 = sbr.rel (0) target = $region5
    $region4: #{tpu_custom_call.1} parent=1 // pred_region
      _
    $region5: #{tpu_custom_call.1} parent=1 // pred_fallthru
      _
    // Predicated region
    $region6: #{tpu_custom_call.1} parent=1 // pred_check
      _
    $region7: #{tpu_custom_call.1} parent=1 // pred_check_branch
      %14 = sbr.rel (0) target = $region9
    $region8: #{tpu_custom_call.1} parent=1 // pred_region
      _
    $region9: #{tpu_custom_call.1} parent=1 // pred_fallthru
      _
    // Predicated region
    $region10: #{tpu_custom_call.1} parent=1 // pred_check
      _
    $region11: #{tpu_custom_call.1} parent=1 // pred_check_branch
      %16 = sbr.rel (0) target = $region13
    $region12: #{tpu_custom_call.1} parent=1 // pred_region
      _
    $region13: #{tpu_custom_call.1} parent=1 // pred_fallthru
      _
    // Predicated region
    $region14: #{tpu_custom_call.1} parent=1 // pred_check
      _
    $region15: #{tpu_custom_call.1} parent=1 // pred_check_branch
      %18 = sbr.rel (0) target = $region17
    $region16: #{tpu_custom_call.1} parent=1 // pred_region
      _
    $region17: #{tpu_custom_call.1} parent=1 // pred_fallthru
      _
    // Predicated region
    $region18: #{tpu_custom_call.1} parent=1 // pred_check
      _
    $region19: #{tpu_custom_call.1} parent=1 // pred_check_branch
      %20 = sbr.rel (0) target = $region21
    $region20: #{tpu_custom_call.1} parent=1 // pred_region
      _
    $region21: #{tpu_custom_call.1} parent=1 // pred_fallthru
      _
    %v22 = vld [vmem:[%s1] sm:$0xff]
    %v23 = vld [vmem:[%s1 + $0x8] sm:$0xff]
    %v24 = vld [vmem:[%s1 + $0x10] sm:$0xff]
    %v25 = vld [vmem:[%s1 + $0x18] sm:$0x1]
    %v26 = vpack.c.bf16 %v23, %v22
    %v27 = vpack.c.bf16 %v25, %v24
    %v28 = vld [vmem:[%s0] sm:$0xff]
    %v29 = vld [vmem:[%s0 + $0x8] sm:$0xff]
    %v30 = vld [vmem:[%s0 + $0x10] sm:$0xff]
    %v31 = vld [vmem:[%s0 + $0x18] sm:$0xff]
    %v32 = vld [vmem:[%s0 + $0x20] sm:$0x1f]
    %v33 = vpack.c.bf16 %v29, %v28
    %v34 = vpack.c.bf16 %v31, %v30
    %v35 = vpack.c.bf16 %v32, %v32
    %v36 = vld [vmem:[%s2] sm:$0xff]
    %v37 = vld [vmem:[%s2 + $0x8] sm:$0xff]
    %v38 = vld [vmem:[%s2 + $0x10] sm:$0xff]
    %v39 = vld [vmem:[%s2 + $0x18] sm:$0x1]
    %41 = vset.pattern.permute.xlu0 0
    %42 = vperm.xlu0 %41, %v36
    %v43 = vpop.permute.xlu0 %42
    %46 = vset.pattern.permute.xlu0 0
    %47 = vperm.xlu0 %46, %v37
    %v48 = vpop.permute.xlu0 %47
    %51 = vset.pattern.permute.xlu0 0
    %52 = vperm.xlu0 %51, %v38
    %v53 = vpop.permute.xlu0 %52
    %56 = vset.pattern.permute.xlu0 0
    %57 = vperm.xlu0 %56, %v39
    %v58 = vpop.permute.xlu0 %57
    %vm60 = vcmask 203776
    %v62 = vsel %vm60, %v26, 0
    %v65 = vsel %vm60, %v27, 0
    %v68 = vsel %vm60, %v33, 0
    %v71 = vsel %vm60, %v34, 0
    %v74 = vsel %vm60, %v35, 0
    %76 = vmatprep.subr.bf16.mxu0 0
    %77 = vmatpush1.bf16.xpose.msra.mxu0 %v68
    %78 = vmatprep.subr.bf16.mxu0 0
    %79 = vmatpush1.bf16.xpose.msra.mxu0 %v71
    %80 = vmatprep.subr.bf16.mxu0 0
    %81 = vmatpush1.bf16.xpose.msra.mxu0 %v74
    %82 = vmatprep.subr.bf16.mxu0 0
    %83 = vmatpush1.bf16.xpose.msra.mxu0 0
    %84 = vmatprep.subr.bf16.mxu0 0
    %85 = vmatpush1.bf16.xpose.msra.mxu0 0
    %86 = vmatprep.subr.bf16.mxu0 0
    %87 = vmatpush1.bf16.xpose.msra.mxu0 0
    %88 = vmatprep.subr.bf16.mxu0 0
    %89 = vmatpush1.bf16.xpose.msra.mxu0 0
    %90 = vmatprep.subr.bf16.mxu0 0
    %91 = vmatpush1.bf16.xpose.msra.mxu0 0
    %92 = vmatprep.subr.bf16.mxu0 0
    %93 = vmatpush1.bf16.xpose.msra.mxu0 0
    %94 = vmatprep.subr.bf16.mxu0 0
    %95 = vmatpush1.bf16.xpose.msra.mxu0 0
    %96 = vmatprep.subr.bf16.mxu0 0
    %97 = vmatpush1.bf16.xpose.msra.mxu0 0
    %98 = vmatprep.subr.bf16.mxu0 0
    %99 = vmatpush1.bf16.xpose.msra.mxu0 0
    %100 = vmatprep.subr.bf16.mxu0 0
    %101 = vmatpush1.bf16.xpose.msra.mxu0 0
    %102 = vmatprep.subr.bf16.mxu0 0
    %103 = vmatpush1.bf16.xpose.msra.mxu0 0
    %104 = vmatprep.subr.bf16.mxu0 0
    %105 = vmatpush1.bf16.xpose.msra.mxu0 0
    %106 = vmatprep.subr.bf16.mxu0 0
    %107 = vmatpush1.bf16.xpose.msra.mxu0 0
    %108 = vmatprep.mubr.bf16.mxu0 0
    %109 = vmatmul.mubr.bf16.gmra.mrb[0].mxu0 %v62
    %v110 = vpop.f32.mrb[0].mxu0
    %v111 = vadd.f32 %v43, %v110
    %v112 = vpop.f32.mrb[0].mxu0
    %v113 = vpop.f32.mrb[0].mxu0
    %v114 = vadd.f32 %v48, %v113
    %v115 = vpop.f32.mrb[0].mxu0
    %116 = vmatprep.mubr.bf16.mxu0 0
    %117 = vmatmul.mubr.bf16.gmra.mrb[0].mxu0 %v65
    %v118 = vpop.f32.mrb[0].mxu0
    %v119 = vadd.f32 %v53, %v118
    %v120 = vpop.f32.mrb[0].mxu0
    %v121 = vpop.f32.mrb[0].mxu0
    %v122 = vadd.f32 %v58, %v121
    %v123 = vpop.f32.mrb[0].mxu0
    %124 = vdwg.mxu0
    %v125 = vmax.f32 %v111, 0.0
    %v126 = vmax.f32 %v114, 0.0
    %v127 = vmax.f32 %v119, 0.0
    %v128 = vmax.f32 %v122, 0.0
    %v129 = vpack.c.bf16 %v126, %v125
    %v130 = vpack.c.bf16 %v128, %v127
    %s131 = scalar_lea.vmem %s1, 32
    %v132 = vld [vmem:[%s131] sm:$0xff]
    %v133 = vld [vmem:[%s131 + $0x8] sm:$0xff]
    %v134 = vld [vmem:[%s131 + $0x10] sm:$0xff]
    %v135 = vld [vmem:[%s131 + $0x18] sm:$0x1]
    %v136 = vpack.c.bf16 %v133, %v132
    %v137 = vpack.c.bf16 %v135, %v134
    %s138 = scalar_lea.vmem %s2, 32
    %v139 = vld [vmem:[%s138] sm:$0xff]
    %v140 = vld [vmem:[%s138 + $0x8] sm:$0xff]
    %v141 = vld [vmem:[%s138 + $0x10] sm:$0xff]
    %v142 = vld [vmem:[%s138 + $0x18] sm:$0x1]
    %144 = vset.pattern.permute.xlu0 0
    %145 = vperm.xlu0 %144, %v139
    %v146 = vpop.permute.xlu0 %145
    %149 = vset.pattern.permute.xlu0 0
    %150 = vperm.xlu0 %149, %v140
    %v151 = vpop.permute.xlu0 %150
    %154 = vset.pattern.permute.xlu0 0
    %155 = vperm.xlu0 %154, %v141
    %v156 = vpop.permute.xlu0 %155
    %159 = vset.pattern.permute.xlu0 0
    %160 = vperm.xlu0 %159, %v142
    %v161 = vpop.permute.xlu0 %160
    %v164 = vsel %vm60, %v136, 0
    %v167 = vsel %vm60, %v137, 0
    %vm169 = vcmask 1043456
    %vm170 = vcmask 1044480
    %v171 = vsel %vm169, 4294967295, 65535
    %v172 = vsel %vm170, %v171, 0
    %v174 = vand.u32 %v130, %v172
    %176 = vmatprep.subr.bf16.mxu0 0
    %177 = vmatpush1.bf16.msra.mxu0 %v129
    %178 = vmatprep.subr.bf16.mxu0 0
    %179 = vmatpush1.bf16.msra.mxu0 %v174
    %180 = vmatprep.subr.bf16.mxu0 0
    %181 = vmatpush1.bf16.msra.mxu0 0
    %182 = vmatprep.subr.bf16.mxu0 0
    %183 = vmatpush1.bf16.msra.mxu0 0
    %184 = vmatprep.subr.bf16.mxu0 0
    %185 = vmatpush1.bf16.msra.mxu0 0
    %186 = vmatprep.subr.bf16.mxu0 0
    %187 = vmatpush1.bf16.msra.mxu0 0
    %188 = vmatprep.subr.bf16.mxu0 0
    %189 = vmatpush1.bf16.msra.mxu0 0
    %190 = vmatprep.subr.bf16.mxu0 0
    %191 = vmatpush1.bf16.msra.mxu0 0
    %192 = vmatprep.subr.bf16.mxu0 0
    %193 = vmatpush1.bf16.msra.mxu0 0
    %194 = vmatprep.subr.bf16.mxu0 0
    %195 = vmatpush1.bf16.msra.mxu0 0
    %196 = vmatprep.subr.bf16.mxu0 0
    %197 = vmatpush1.bf16.msra.mxu0 0
    %198 = vmatprep.subr.bf16.mxu0 0
    %199 = vmatpush1.bf16.msra.mxu0 0
    %200 = vmatprep.subr.bf16.mxu0 0
    %201 = vmatpush1.bf16.msra.mxu0 0
    %202 = vmatprep.subr.bf16.mxu0 0
    %203 = vmatpush1.bf16.msra.mxu0 0
    %204 = vmatprep.subr.bf16.mxu0 0
    %205 = vmatpush1.bf16.msra.mxu0 0
    %206 = vmatprep.subr.bf16.mxu0 0
    %207 = vmatpush1.bf16.msra.mxu0 0
    %208 = vmatprep.mubr.bf16.mxu0 0
    %209 = vmatmul.mubr.bf16.gmra.mrb[0].mxu0 %v164
    %v210 = vpop.f32.mrb[0].mxu0
    %v211 = vadd.f32 %v146, %v210
    %v212 = vpop.f32.mrb[0].mxu0
    %v213 = vpop.f32.mrb[0].mxu0
    %v214 = vadd.f32 %v151, %v213
    %v215 = vpop.f32.mrb[0].mxu0
    %216 = vmatprep.mubr.bf16.mxu0 0
    %217 = vmatmul.mubr.bf16.gmra.mrb[0].mxu0 %v167
    %v218 = vpop.f32.mrb[0].mxu0
    %v219 = vadd.f32 %v156, %v218
    %v220 = vpop.f32.mrb[0].mxu0
    %v221 = vpop.f32.mrb[0].mxu0
    %v222 = vadd.f32 %v161, %v221
    %v223 = vpop.f32.mrb[0].mxu0
    %224 = vdwg.mxu0
    %v225 = vmax.f32 %v211, 0.0
    %v226 = vmax.f32 %v214, 0.0
    %v227 = vmax.f32 %v219, 0.0
    %v228 = vmax.f32 %v222, 0.0
    %v229 = vpack.c.bf16 %v226, %v225
    %v230 = vpack.c.bf16 %v228, %v227
    %s231 = scalar_lea.vmem %s1, 64
    %v232 = vld [vmem:[%s231] sm:$0xff]
    %v233 = vld [vmem:[%s231 + $0x8] sm:$0xff]
    %v234 = vld [vmem:[%s231 + $0x10] sm:$0xff]
    %v235 = vld [vmem:[%s231 + $0x18] sm:$0x1]
    %v236 = vpack.c.bf16 %v233, %v232
    %v237 = vpack.c.bf16 %v235, %v234
    %s238 = scalar_lea.vmem %s2, 64
    %v239 = vld [vmem:[%s238] sm:$0xff]
    %v240 = vld [vmem:[%s238 + $0x8] sm:$0xff]
    %v241 = vld [vmem:[%s238 + $0x10] sm:$0xff]
    %v242 = vld [vmem:[%s238 + $0x18] sm:$0x1]
    %244 = vset.pattern.permute.xlu0 0
    %245 = vperm.xlu0 %244, %v239
    %v246 = vpop.permute.xlu0 %245
    %249 = vset.pattern.permute.xlu0 0
    %250 = vperm.xlu0 %249, %v240
    %v251 = vpop.permute.xlu0 %250
    %254 = vset.pattern.permute.xlu0 0
    %255 = vperm.xlu0 %254, %v241
    %v256 = vpop.permute.xlu0 %255
    %259 = vset.pattern.permute.xlu0 0
    %260 = vperm.xlu0 %259, %v242
    %v261 = vpop.permute.xlu0 %260
    %v264 = vsel %vm60, %v236, 0
    %v267 = vsel %vm60, %v237, 0
    %v270 = vand.u32 %v230, %v172
    %272 = vmatprep.subr.bf16.mxu0 0
    %273 = vmatpush1.bf16.msra.mxu0 %v229
    %274 = vmatprep.subr.bf16.mxu0 0
    %275 = vmatpush1.bf16.msra.mxu0 %v270
    %276 = vmatprep.subr.bf16.mxu0 0
    %277 = vmatpush1.bf16.msra.mxu0 0
    %278 = vmatprep.subr.bf16.mxu0 0
    %279 = vmatpush1.bf16.msra.mxu0 0
    %280 = vmatprep.subr.bf16.mxu0 0
    %281 = vmatpush1.bf16.msra.mxu0 0
    %282 = vmatprep.subr.bf16.mxu0 0
    %283 = vmatpush1.bf16.msra.mxu0 0
    %284 = vmatprep.subr.bf16.mxu0 0
    %285 = vmatpush1.bf16.msra.mxu0 0
    %286 = vmatprep.subr.bf16.mxu0 0
    %287 = vmatpush1.bf16.msra.mxu0 0
    %288 = vmatprep.subr.bf16.mxu0 0
    %289 = vmatpush1.bf16.msra.mxu0 0
    %290 = vmatprep.subr.bf16.mxu0 0
    %291 = vmatpush1.bf16.msra.mxu0 0
    %292 = vmatprep.subr.bf16.mxu0 0
    %293 = vmatpush1.bf16.msra.mxu0 0
    %294 = vmatprep.subr.bf16.mxu0 0
    %295 = vmatpush1.bf16.msra.mxu0 0
    %296 = vmatprep.subr.bf16.mxu0 0
    %297 = vmatpush1.bf16.msra.mxu0 0
    %298 = vmatprep.subr.bf16.mxu0 0
    %299 = vmatpush1.bf16.msra.mxu0 0
    %300 = vmatprep.subr.bf16.mxu0 0
    %301 = vmatpush1.bf16.msra.mxu0 0
    %302 = vmatprep.subr.bf16.mxu0 0
    %303 = vmatpush1.bf16.msra.mxu0 0
    %304 = vmatprep.mubr.bf16.mxu0 0
    %305 = vmatmul.mubr.bf16.gmra.mrb[0].mxu0 %v264
    %v306 = vpop.f32.mrb[0].mxu0
    %v307 = vadd.f32 %v246, %v306
    %v308 = vpop.f32.mrb[0].mxu0
    %v309 = vpop.f32.mrb[0].mxu0
    %v310 = vadd.f32 %v251, %v309
    %v311 = vpop.f32.mrb[0].mxu0
    %312 = vmatprep.mubr.bf16.mxu0 0
    %313 = vmatmul.mubr.bf16.gmra.mrb[0].mxu0 %v267
    %v314 = vpop.f32.mrb[0].mxu0
    %v315 = vadd.f32 %v256, %v314
    %v316 = vpop.f32.mrb[0].mxu0
    %v317 = vpop.f32.mrb[0].mxu0
    %v318 = vadd.f32 %v261, %v317
    %v319 = vpop.f32.mrb[0].mxu0
    %320 = vdwg.mxu0
    %v321 = vmax.f32 %v307, 0.0
    %v322 = vmax.f32 %v310, 0.0
    %v323 = vmax.f32 %v315, 0.0
    %v324 = vmax.f32 %v318, 0.0
    %v325 = vpack.c.bf16 %v322, %v321
    %v326 = vpack.c.bf16 %v324, %v323
    %v327 = vld [vmem:[%s3] sm:$0x3]
    %v328 = vpack.c.bf16 %v327, %v327
    %v329 = vld [vmem:[%s4] sm:$0x3]
    %331 = vset.pattern.permute.xlu0 0
    %332 = vperm.xlu0 %331, %v329
    %v333 = vpop.permute.xlu0 %332
    %v336 = vsel %vm60, %v328, 0
    %v339 = vand.u32 %v326, %v172
    %341 = vmatprep.subr.bf16.mxu0 0
    %342 = vmatpush1.bf16.msra.mxu0 %v325
    %343 = vmatprep.subr.bf16.mxu0 0
    %344 = vmatpush1.bf16.msra.mxu0 %v339
    %345 = vmatprep.subr.bf16.mxu0 0
    %346 = vmatpush1.bf16.msra.mxu0 0
    %347 = vmatprep.subr.bf16.mxu0 0
    %348 = vmatpush1.bf16.msra.mxu0 0
    %349 = vmatprep.subr.bf16.mxu0 0
    %350 = vmatpush1.bf16.msra.mxu0 0
    %351 = vmatprep.subr.bf16.mxu0 0
    %352 = vmatpush1.bf16.msra.mxu0 0
    %353 = vmatprep.subr.bf16.mxu0 0
    %354 = vmatpush1.bf16.msra.mxu0 0
    %355 = vmatprep.subr.bf16.mxu0 0
    %356 = vmatpush1.bf16.msra.mxu0 0
    %357 = vmatprep.subr.bf16.mxu0 0
    %358 = vmatpush1.bf16.msra.mxu0 0
    %359 = vmatprep.subr.bf16.mxu0 0
    %360 = vmatpush1.bf16.msra.mxu0 0
    %361 = vmatprep.subr.bf16.mxu0 0
    %362 = vmatpush1.bf16.msra.mxu0 0
    %363 = vmatprep.subr.bf16.mxu0 0
    %364 = vmatpush1.bf16.msra.mxu0 0
    %365 = vmatprep.subr.bf16.mxu0 0
    %366 = vmatpush1.bf16.msra.mxu0 0
    %367 = vmatprep.subr.bf16.mxu0 0
    %368 = vmatpush1.bf16.msra.mxu0 0
    %369 = vmatprep.subr.bf16.mxu0 0
    %370 = vmatpush1.bf16.msra.mxu0 0
    %371 = vmatprep.subr.bf16.mxu0 0
    %372 = vmatpush1.bf16.msra.mxu0 0
    %373 = vmatprep.mubr.bf16.mxu0 0
    %374 = vmatmul.mubr.bf16.gmra.mrb[0].mxu0 %v336
    %v375 = vpop.f32.mrb[0].mxu0
    %v376 = vadd.f32 %v333, %v375
    %v377 = vpop.f32.mrb[0].mxu0
    %v378 = vpop.f32.mrb[0].mxu0
    %v379 = vpop.f32.mrb[0].mxu0
    %380 = vdwg.mxu0
    %vm381 = vcmask 295936
    %382 = vst.msk [vmem:[#allocation2] sm:$0x3] %vm381, %v376
    // Predicated region
    $region22: #{tpu_custom_call.1} parent=1 // pred_check
      _
    $region23: #{tpu_custom_call.1} parent=1 // pred_check_branch
      %384 = sbr.rel (0) target = $region25
    $region24: #{tpu_custom_call.1} parent=1 // pred_region
      %s386 = ssub.s32 32, 32
      %387 = vsyncadd [#allocation3], %s386
      %s389 = sshll.u32 [#allocation2], 4
      %s390 = int_to_ptr.vmem [resolvable:$true] %s389
      %392 = dma.vmem_to_hbm [thread:$0]  %s390, 32, %s5, [#allocation3]
    $region25: #{tpu_custom_call.1} parent=1 // pred_fallthru
      _
    // Predicated region
    $region26: #{tpu_custom_call.1} parent=1 // pred_check
      _
    $region27: #{tpu_custom_call.1} parent=1 // pred_check_branch
      %394 = sbr.rel (0) target = $region29
    $region28: #{tpu_custom_call.1} parent=1 // pred_region
      %395 = dma.done [#allocation3], 32
    $region29: #{tpu_custom_call.1} parent=1 // pred_fallthru
      _
    %396 = vsyncpa [#allocation3], 1

</llo_original>
